<compile_context>
chip_gen: v7x
topology: tpu7x:2x2x1
jax: 0.10.0
libtpu: 0.0.40
codegen_flags: <defaults>
</compile_context>

<pallas_src>
import jax
import jax.numpy as jnp
from jax.experimental import pallas as pl
from jax.experimental.pallas import tpu as pltpu

# ---- synthetic config (mtgnnConfig) -----------------------------------------
N_HEADS = 4
HIDDEN = 32
FEAT_DIM = 32          # config.feat_dim  (data.x feature dim)
IN_DIM = 16            # config.in_dim    (prototype / pre_emb feature dim)
N = 16                 # number of graph nodes (rows of data.x / pre_emb)
P = 8                  # number of prototypes
HH = N_HEADS * HIDDEN  # 128 -> lane-dense projections / output


def _track_builder_kernel(x_ref, pre_ref, proto_ref, wv_ref, wq_ref, wk_ref,
                          b_ref, rep_ref, trackh_ref, attn_ref):
    # ---------------- projections: three exact MXU matmuls (no scratch slab) --
    v = jnp.dot(x_ref[...], wv_ref[...],
                preferred_element_type=jnp.float32) + b_ref[0:1, :]        # (N, HH)
    q = jnp.dot(pre_ref[...], wq_ref[...],
                preferred_element_type=jnp.float32) + b_ref[1:2, :]        # (N, HH)
    k = jnp.dot(proto_ref[...], wk_ref[...],
                preferred_element_type=jnp.float32) + b_ref[2:3, :]        # (P, HH)

    # ---------------- all-head scores via one batched contraction -------------
    qh = jnp.stack([q[:, h * HIDDEN:(h + 1) * HIDDEN]
                    for h in range(N_HEADS)])                              # (H, N, hid)
    kh = jnp.stack([k[:, h * HIDDEN:(h + 1) * HIDDEN]
                    for h in range(N_HEADS)])                              # (H, P, hid)
    scores = jnp.einsum('hpd,hnd->hpn', kh, qh,
                        preferred_element_type=jnp.float32)                # (H, P, N)

    # ---------------- softmax over prototypes, all heads at once --------------
    m = jnp.max(scores, axis=1, keepdims=True)                             # (H, 1, N)
    e = jnp.exp(scores - m)
    denom = jnp.sum(e, axis=1, keepdims=True)                              # (H, 1, N)
    alpha = e * pl.reciprocal(denom, approx=True)                          # (H, P, N)

    # attention output: mean over heads -> (N, P)
    attn_ref[...] = jnp.transpose(jnp.sum(alpha, axis=0)) * (1.0 / N_HEADS)

    # sharp_alpha = exp(-entropy), entropy over prototypes (eps inside log only)
    entropy = -jnp.sum(alpha * jnp.log(alpha + 1e-6),
                       axis=1, keepdims=True)                              # (H, 1, N)
    walpha = alpha * jnp.exp(-entropy)                                     # (H, P, N)

    # ---------------- lane-dense track_h ---------------------------------------
    # scale[p*N+n, c] = walpha[head(c), p, n]: one MXU push replicates every
    # per-(head, p, n) scalar across its 32-lane head block via the constant
    # REP matrix, so the final store is a single unmasked full-lane write.
    walpha2 = walpha.reshape(N_HEADS, P * N)                               # (H, P*N)
    scale = jnp.dot(jnp.transpose(walpha2), rep_ref[...],
                    preferred_element_type=jnp.float32)                    # (P*N, HH)
    trackh_ref[...] = scale.reshape(P, N, HH) * v[None, :, :]              # (P, N, HH)


def pack_params(bv, bq, bk):
    """Init-time packing: bias rows into one (3, HH) array and the constant
    head-block replication matrix REP[h, c] = 1 iff c // HIDDEN == h."""
    b_all = jnp.concatenate([bv, bq, bk], axis=0)                          # (3, HH)
    lane_head = jnp.arange(HH, dtype=jnp.int32) // HIDDEN
    rep = (lane_head[None, :] ==
           jnp.arange(N_HEADS, dtype=jnp.int32)[:, None]).astype(jnp.float32)
    return b_all, rep                                                      # (3,HH), (H,HH)


_COST = pl.CostEstimate(flops=400_000, transcendentals=1_200,
                        bytes_accessed=106_000)
_VMEM_SPEC = pl.BlockSpec(memory_space=pltpu.MemorySpace.VMEM)


@jax.jit
def track_builder_forward(prototype, pre_emb, x, wv, wq, wk, b_all, rep):
    """forward(prototype, pre_emb, data) -> (track_h (P,N,HH), attn (N,P))."""
    track_h, attn = pl.pallas_call(
        _track_builder_kernel,
        in_specs=[_VMEM_SPEC] * 8,
        out_specs=(_VMEM_SPEC, _VMEM_SPEC),
        out_shape=(jax.ShapeDtypeStruct((P, N, HH), jnp.float32),
                   jax.ShapeDtypeStruct((N, P), jnp.float32)),
        cost_estimate=_COST,
    )(x, pre_emb, prototype, wv, wq, wk, b_all, rep)
    return track_h, attn


def _reference(prototype, pre_emb, x, wv, bv, wq, bq, wk, bk):
    """Pure-JAX reference mirroring the torch code path."""
    v = x @ wv + bv
    q = pre_emb @ wq + bq
    k = prototype @ wk + bk
    vh = jnp.stack([v[:, i * HIDDEN:(i + 1) * HIDDEN] for i in range(N_HEADS)])   # (H,N,hid)
    qh = jnp.stack([q[:, i * HIDDEN:(i + 1) * HIDDEN] for i in range(N_HEADS)])
    kh = jnp.stack([k[:, i * HIDDEN:(i + 1) * HIDDEN] for i in range(N_HEADS)])
    alpha1 = jnp.einsum('hnd,hpd->hnp', qh, kh)
    alpha = jax.nn.softmax(alpha1, axis=-1)                                        # (H,N,P)
    attn = jnp.mean(alpha, axis=0)
    entropy = -jnp.sum(alpha * jnp.log(alpha + 1e-6), axis=-1)                     # (H,N)
    sharp = jnp.exp(-entropy)
    track = vh[:, :, None, :] * alpha[..., None]                                   # (H,N,P,hid)
    track = track * sharp[:, :, None, None]
    track = jnp.concatenate([track[i] for i in range(N_HEADS)], axis=-1)           # (N,P,HH)
    return jnp.transpose(track, (1, 0, 2)), attn


if __name__ == "__main__":
    key = jax.random.PRNGKey(0)
    ks = jax.random.split(key, 9)

    # deterministic synthetic parameters (Linear weights stored as (in, out))
    wv = jax.random.normal(ks[0], (FEAT_DIM, HH), jnp.float32) * 0.1
    bv = jax.random.normal(ks[1], (1, HH), jnp.float32) * 0.01
    wq = jax.random.normal(ks[2], (IN_DIM, HH), jnp.float32) * 0.1
    bq = jax.random.normal(ks[3], (1, HH), jnp.float32) * 0.01
    wk = jax.random.normal(ks[4], (IN_DIM, HH), jnp.float32) * 0.1
    bk = jax.random.normal(ks[5], (1, HH), jnp.float32) * 0.01

    # deterministic synthetic inputs
    prototype = jax.random.normal(ks[6], (P, IN_DIM), jnp.float32)   # prototype
    pre_emb = jax.random.normal(ks[7], (N, IN_DIM), jnp.float32)     # pre_emb
    x = jax.random.normal(ks[8], (N, FEAT_DIM), jnp.float32)         # data.x

    # one-time packing (equivalent of module init)
    b_all, rep = pack_params(bv, bq, bk)

    track_h, attn = track_builder_forward(prototype, pre_emb, x,
                                          wv, wq, wk, b_all, rep)
    jax.block_until_ready((track_h, attn))

    ref_track, ref_attn = _reference(prototype, pre_emb, x, wv, bv, wq, bq, wk, bk)
    assert track_h.shape == (P, N, HH) and attn.shape == (N, P)
    # tolerance loosened vs the exact-divide version because the softmax
    # denominator uses pl.reciprocal(approx=True) (EUP vrcp).
    assert jnp.allclose(track_h, ref_track, atol=1e-3, rtol=1e-3)
    assert jnp.allclose(attn, ref_attn, atol=1e-3, rtol=1e-3)

    # TODO(synk): dropout layers are identity at inference and out_layer /
    # raw_query_input are unused in forward(), so they are intentionally omitted.
    print("KERNEL_OK")
</pallas_src>

<mosaic_0001>
module attributes {stable_mosaic.version = 11 : i64} {
  func.func @_track_builder_kernel(%arg0: memref<16x32xf32, #tpu.memory_space<vmem>>, %arg1: memref<16x16xf32, #tpu.memory_space<vmem>>, %arg2: memref<8x16xf32, #tpu.memory_space<vmem>>, %arg3: memref<32x128xf32, #tpu.memory_space<vmem>>, %arg4: memref<16x128xf32, #tpu.memory_space<vmem>>, %arg5: memref<16x128xf32, #tpu.memory_space<vmem>>, %arg6: memref<3x128xf32, #tpu.memory_space<vmem>>, %arg7: memref<4x128xf32, #tpu.memory_space<vmem>>, %arg8: memref<8x16x128xf32, #tpu.memory_space<vmem>>, %arg9: memref<16x8xf32, #tpu.memory_space<vmem>>) attributes {dimension_semantics = [], scalar_prefetch = 0 : i64, scratch_operands = 0 : i64, tpu.core_type = #tpu.core_type<tc>} {
    %c0 = arith.constant 0 : index
    %c0_0 = arith.constant 0 : index
    %0 = vector.load %arg0[%c0, %c0_0] : memref<16x32xf32, #tpu.memory_space<vmem>>, vector<16x32xf32>
    %c0_1 = arith.constant 0 : index
    %c0_2 = arith.constant 0 : index
    %1 = vector.load %arg3[%c0_1, %c0_2] : memref<32x128xf32, #tpu.memory_space<vmem>>, vector<32x128xf32>
    %cst = arith.constant dense<0.000000e+00> : vector<16x128xf32>
    %2 = tpu.matmul %0, %1, %cst {dimension_numbers = #tpu.dot_dimension_numbers<[1], [0], [0], [1], [0, 0, 1, 1], [], []>} : vector<16x32xf32>, vector<32x128xf32>, vector<16x128xf32> -> vector<16x128xf32>
    %c0_3 = arith.constant 0 : index
    %c0_4 = arith.constant 0 : index
    %3 = vector.load %arg6[%c0_3, %c0_4] : memref<3x128xf32, #tpu.memory_space<vmem>>, vector<1x128xf32>
    %4 = vector.broadcast %3 : vector<1x128xf32> to vector<16x128xf32>
    %5 = arith.addf %2, %4 : vector<16x128xf32>
    %c0_5 = arith.constant 0 : index
    %c0_6 = arith.constant 0 : index
    %6 = vector.load %arg1[%c0_5, %c0_6] : memref<16x16xf32, #tpu.memory_space<vmem>>, vector<16x16xf32>
    %c0_7 = arith.constant 0 : index
    %c0_8 = arith.constant 0 : index
    %7 = vector.load %arg4[%c0_7, %c0_8] : memref<16x128xf32, #tpu.memory_space<vmem>>, vector<16x128xf32>
    %cst_9 = arith.constant dense<0.000000e+00> : vector<16x128xf32>
    %8 = tpu.matmul %6, %7, %cst_9 {dimension_numbers = #tpu.dot_dimension_numbers<[1], [0], [0], [1], [0, 0, 1, 1], [], []>} : vector<16x16xf32>, vector<16x128xf32>, vector<16x128xf32> -> vector<16x128xf32>
    %c1 = arith.constant 1 : index
    %c0_10 = arith.constant 0 : index
    %9 = vector.load %arg6[%c1, %c0_10] : memref<3x128xf32, #tpu.memory_space<vmem>>, vector<1x128xf32>
    %10 = vector.broadcast %9 : vector<1x128xf32> to vector<16x128xf32>
    %11 = arith.addf %8, %10 : vector<16x128xf32>
    %c0_11 = arith.constant 0 : index
    %c0_12 = arith.constant 0 : index
    %12 = vector.load %arg2[%c0_11, %c0_12] : memref<8x16xf32, #tpu.memory_space<vmem>>, vector<8x16xf32>
    %c0_13 = arith.constant 0 : index
    %c0_14 = arith.constant 0 : index
    %13 = vector.load %arg5[%c0_13, %c0_14] : memref<16x128xf32, #tpu.memory_space<vmem>>, vector<16x128xf32>
    %cst_15 = arith.constant dense<0.000000e+00> : vector<8x128xf32>
    %14 = tpu.matmul %12, %13, %cst_15 {dimension_numbers = #tpu.dot_dimension_numbers<[1], [0], [0], [1], [0, 0, 1, 1], [], []>} : vector<8x16xf32>, vector<16x128xf32>, vector<8x128xf32> -> vector<8x128xf32>
    %c2 = arith.constant 2 : index
    %c0_16 = arith.constant 0 : index
    %15 = vector.load %arg6[%c2, %c0_16] : memref<3x128xf32, #tpu.memory_space<vmem>>, vector<1x128xf32>
    %16 = vector.broadcast %15 : vector<1x128xf32> to vector<8x128xf32>
    %17 = arith.addf %14, %16 : vector<8x128xf32>
    %18 = vector.extract_strided_slice %11 {offsets = [0, 0], sizes = [16, 32], strides = [1, 1]} : vector<16x128xf32> to vector<16x32xf32>
    %19 = vector.extract_strided_slice %11 {offsets = [0, 32], sizes = [16, 32], strides = [1, 1]} : vector<16x128xf32> to vector<16x32xf32>
    %20 = vector.extract_strided_slice %11 {offsets = [0, 64], sizes = [16, 32], strides = [1, 1]} : vector<16x128xf32> to vector<16x32xf32>
    %21 = vector.extract_strided_slice %11 {offsets = [0, 96], sizes = [16, 32], strides = [1, 1]} : vector<16x128xf32> to vector<16x32xf32>
    %22 = vector.shape_cast %18 : vector<16x32xf32> to vector<1x16x32xf32>
    %23 = vector.shape_cast %19 : vector<16x32xf32> to vector<1x16x32xf32>
    %24 = vector.shape_cast %20 : vector<16x32xf32> to vector<1x16x32xf32>
    %25 = vector.shape_cast %21 : vector<16x32xf32> to vector<1x16x32xf32>
    %26 = tpu.concatenate %22, %23, %24, %25 in 0 : vector<1x16x32xf32>, vector<1x16x32xf32>, vector<1x16x32xf32>, vector<1x16x32xf32> -> vector<4x16x32xf32>
    %27 = vector.extract_strided_slice %17 {offsets = [0, 0], sizes = [8, 32], strides = [1, 1]} : vector<8x128xf32> to vector<8x32xf32>
    %28 = vector.extract_strided_slice %17 {offsets = [0, 32], sizes = [8, 32], strides = [1, 1]} : vector<8x128xf32> to vector<8x32xf32>
    %29 = vector.extract_strided_slice %17 {offsets = [0, 64], sizes = [8, 32], strides = [1, 1]} : vector<8x128xf32> to vector<8x32xf32>
    %30 = vector.extract_strided_slice %17 {offsets = [0, 96], sizes = [8, 32], strides = [1, 1]} : vector<8x128xf32> to vector<8x32xf32>
    %31 = vector.shape_cast %27 : vector<8x32xf32> to vector<1x8x32xf32>
    %32 = vector.shape_cast %28 : vector<8x32xf32> to vector<1x8x32xf32>
    %33 = vector.shape_cast %29 : vector<8x32xf32> to vector<1x8x32xf32>
    %34 = vector.shape_cast %30 : vector<8x32xf32> to vector<1x8x32xf32>
    %35 = tpu.concatenate %31, %32, %33, %34 in 0 : vector<1x8x32xf32>, vector<1x8x32xf32>, vector<1x8x32xf32>, vector<1x8x32xf32> -> vector<4x8x32xf32>
    "tpu.trace_start"() <{level = 10 : i32, message = "hpd,hnd->hpn"}> : () -> ()
    %cst_17 = arith.constant dense<0.000000e+00> : vector<4x8x16xf32>
    %36 = tpu.matmul %35, %26, %cst_17 {dimension_numbers = #tpu.dot_dimension_numbers<[2], [2], [1], [1], [0, 0, 0, 1, 1, 1], [0], [0]>} : vector<4x8x32xf32>, vector<4x16x32xf32>, vector<4x8x16xf32> -> vector<4x8x16xf32>
    "tpu.trace_stop"() : () -> ()
    %cst_18 = arith.constant dense<0xFF800000> : vector<4x16xf32>
    %37 = vector.multi_reduction <maximumf>, %36, %cst_18 [1] : vector<4x8x16xf32> to vector<4x16xf32>
    %38 = vector.shape_cast %37 : vector<4x16xf32> to vector<4x1x16xf32>
    %39 = vector.broadcast %38 : vector<4x1x16xf32> to vector<4x8x16xf32>
    %40 = arith.subf %36, %39 : vector<4x8x16xf32>
    %41 = math.exp %40 : vector<4x8x16xf32>
    %cst_19 = arith.constant dense<0.000000e+00> : vector<4x16xf32>
    %42 = vector.multi_reduction <add>, %41, %cst_19 [1] : vector<4x8x16xf32> to vector<4x16xf32>
    %43 = vector.shape_cast %42 : vector<4x16xf32> to vector<4x1x16xf32>
    %44 = tpu.reciprocal %43 {approx = true} : vector<4x1x16xf32> -> vector<4x1x16xf32>
    %45 = vector.broadcast %44 : vector<4x1x16xf32> to vector<4x8x16xf32>
    %46 = arith.mulf %41, %45 : vector<4x8x16xf32>
    %cst_20 = arith.constant dense<0.000000e+00> : vector<8x16xf32>
    %47 = vector.multi_reduction <add>, %46, %cst_20 [0] : vector<4x8x16xf32> to vector<8x16xf32>
    %48 = tpu.transpose %47, [1, 0] : vector<8x16xf32> -> vector<16x8xf32>
    %cst_21 = arith.constant 2.500000e-01 : f32
    %49 = vector.broadcast %cst_21 : f32 to vector<16x8xf32>
    %50 = arith.mulf %48, %49 : vector<16x8xf32>
    %c0_22 = arith.constant 0 : index
    %c0_23 = arith.constant 0 : index
    %51 = vector.load %arg9[%c0_22, %c0_23] : memref<16x8xf32, #tpu.memory_space<vmem>>, vector<16x8xf32>
    tpu.vector_store %arg9[%c0_22, %c0_23], %50 {strides = array<i32>} : memref<16x8xf32, #tpu.memory_space<vmem>>, vector<16x8xf32>,
    %cst_24 = arith.constant 9.99999997E-7 : f32
    %52 = vector.broadcast %cst_24 : f32 to vector<4x8x16xf32>
    %53 = arith.addf %46, %52 : vector<4x8x16xf32>
    %54 = math.log %53 : vector<4x8x16xf32>
    %55 = arith.mulf %46, %54 : vector<4x8x16xf32>
    %cst_25 = arith.constant dense<0.000000e+00> : vector<4x16xf32>
    %56 = vector.multi_reduction <add>, %55, %cst_25 [1] : vector<4x8x16xf32> to vector<4x16xf32>
    %57 = vector.shape_cast %56 : vector<4x16xf32> to vector<4x1x16xf32>
    %cst_26 = arith.constant 0.000000e+00 : f32
    %58 = vector.broadcast %cst_26 : f32 to vector<4x1x16xf32>
    %59 = arith.subf %58, %57 : vector<4x1x16xf32>
    %cst_27 = arith.constant 0.000000e+00 : f32
    %60 = vector.broadcast %cst_27 : f32 to vector<4x1x16xf32>
    %61 = arith.subf %60, %59 : vector<4x1x16xf32>
    %62 = math.exp %61 : vector<4x1x16xf32>
    %63 = vector.broadcast %62 : vector<4x1x16xf32> to vector<4x8x16xf32>
    %64 = arith.mulf %46, %63 : vector<4x8x16xf32>
    %65 = vector.shape_cast %64 : vector<4x8x16xf32> to vector<4x128xf32>
    %66 = tpu.transpose %65, [1, 0] : vector<4x128xf32> -> vector<128x4xf32>
    %c0_28 = arith.constant 0 : index
    %c0_29 = arith.constant 0 : index
    %67 = vector.load %arg7[%c0_28, %c0_29] : memref<4x128xf32, #tpu.memory_space<vmem>>, vector<4x128xf32>
    %cst_30 = arith.constant dense<0.000000e+00> : vector<128x128xf32>
    %68 = tpu.matmul %66, %67, %cst_30 {dimension_numbers = #tpu.dot_dimension_numbers<[1], [0], [0], [1], [0, 0, 1, 1], [], []>} : vector<128x4xf32>, vector<4x128xf32>, vector<128x128xf32> -> vector<128x128xf32>
    %69 = vector.shape_cast %68 : vector<128x128xf32> to vector<8x16x128xf32>
    %70 = vector.shape_cast %5 : vector<16x128xf32> to vector<1x16x128xf32>
    %71 = vector.broadcast %70 : vector<1x16x128xf32> to vector<8x16x128xf32>
    %72 = arith.mulf %69, %71 : vector<8x16x128xf32>
    %c0_31 = arith.constant 0 : index
    %c0_32 = arith.constant 0 : index
    %c0_33 = arith.constant 0 : index
    %73 = vector.load %arg8[%c0_31, %c0_32, %c0_33] : memref<8x16x128xf32, #tpu.memory_space<vmem>>, vector<8x16x128xf32>
    tpu.vector_store %arg8[%c0_31, %c0_32, %c0_33], %72 {strides = array<i32>} : memref<8x16x128xf32, #tpu.memory_space<vmem>>, vector<8x16x128xf32>,
    return
  }
}

</mosaic_0001>

<llo_original>
// kernel: track_builder_forward.1
$region0: #{track_builder_forward.1}
  #allocation0 [shape = 'u32[]', space=smem, size = 0x4, offset = 0x4, fixed_abs, tag = 'smem constant byte address 0x4 - core index']
  #allocation1 [shape = 'u32[144,128]{1,0:T(1,128)}', space=vmem, size = 0x12000, scoped, tag = 'internal scratch']
  %s0 = inlined_call_operand.hbm [shape: f32[16,32], index: 0, kind: input, shape index: {}]
  %s1 = inlined_call_operand.hbm [shape: f32[16,16], index: 1, kind: input, shape index: {}]
  %s2 = inlined_call_operand.hbm [shape: f32[8,16], index: 2, kind: input, shape index: {}]
  %s3 = inlined_call_operand.hbm [shape: f32[32,128], index: 3, kind: input, shape index: {}]
  %s4 = inlined_call_operand.hbm [shape: f32[16,128], index: 4, kind: input, shape index: {}]
  %s5 = inlined_call_operand.vmem [shape: f32[16,128], index: 5, kind: input, shape index: {}]
  %s6 = inlined_call_operand.vmem [shape: f32[3,128], index: 6, kind: input, shape index: {}]
  %s7 = inlined_call_operand.vmem [shape: f32[4,128], index: 7, kind: input, shape index: {}]
  %s8 = inlined_call_operand.hbm [shape: f32[8,16,128], index: 8, kind: output, shape index: {0}]
  %s9 = inlined_call_operand.vmem [shape: f32[16,8], index: 9, kind: output, shape index: {1}]
  %10 = xla_tuple %s8, %s9
  %s11 = sld [smem:[#allocation0]]
  $region70: #{track_builder_forward.1} parent=0
    _
  %s13 = ssub.s32 1, %s11
  %s14 = scalar_select 0, %s13, %s11
  $region1: #{track_builder_forward.1} parent=0
    #allocation2 [shape = 'u8[8192]{0}', space=vmem, size = 0x2000, scoped, tag = 'input window, operand 0, single buffered']
    #allocation3 [shape = 's32[1]{0}', space=sflag, size = 0x4, scoped, tag = 'scoped memory for track_builder_forward.1']
    #allocation4 [shape = 's32[1]{0}', space=sflag, size = 0x4, scoped, tag = 'scoped memory for track_builder_forward.1']
    #allocation5 [shape = 'u8[8192]{0}', space=vmem, size = 0x2000, scoped, tag = 'input window, operand 1, single buffered']
    #allocation6 [shape = 's32[1]{0}', space=sflag, size = 0x4, scoped, tag = 'scoped memory for track_builder_forward.1']
    #allocation7 [shape = 'u8[4096]{0}', space=vmem, size = 0x1000, scoped, tag = 'input window, operand 2, single buffered']
    #allocation8 [shape = 'u8[16384]{0}', space=vmem, size = 0x4000, scoped, tag = 'input window, operand 3, single buffered']
    #allocation9 [shape = 's32[1]{0}', space=sflag, size = 0x4, scoped, tag = 'scoped memory for track_builder_forward.1']
    #allocation10 [shape = 'u8[8192]{0}', space=vmem, size = 0x2000, scoped, tag = 'input window, operand 4, single buffered']
    #allocation11 [shape = 'u8[65536]{0}', space=vmem, size = 0x10000, scoped, tag = 'output window, operand 0, single buffered']
    %15 = vsyncpa [#allocation3], 0
    %16 = vsyncpa [#allocation6], 0
    %17 = vsyncpa [#allocation9], 0
    %18 = vsyncpa [#allocation4], 0
    // Predicated region
    $region2: #{track_builder_forward.1} parent=1 // pred_check
      _
    $region3: #{track_builder_forward.1} parent=1 // pred_check_branch
      %20 = sbr.rel (0) target = $region5
    $region4: #{track_builder_forward.1} parent=1 // pred_region
      %s22 = ssub.s32 256, 256
      %23 = vsyncadd [#allocation3], %s22
      %s24 = sshll.u32 [#allocation2], 4
      %s25 = int_to_ptr.vmem [resolvable:$true] %s24
      %30 = dma.hbm_to_vmem [thread:$0]  %s0, 256, %s25, [#allocation3], 128, 128, 8
    $region5: #{track_builder_forward.1} parent=1 // pred_fallthru
      _
    // Predicated region
    $region6: #{track_builder_forward.1} parent=1 // pred_check
      _
    $region7: #{track_builder_forward.1} parent=1 // pred_check_branch
      %32 = sbr.rel (0) target = $region9
    $region8: #{track_builder_forward.1} parent=1 // pred_region
      %s34 = ssub.s32 256, 256
      %35 = vsyncadd [#allocation6], %s34
      %s36 = sshll.u32 [#allocation5], 4
      %s37 = int_to_ptr.vmem [resolvable:$true] %s36
      %42 = dma.hbm_to_vmem [thread:$0]  %s1, 256, %s37, [#allocation6], 128, 128, 8
    $region9: #{track_builder_forward.1} parent=1 // pred_fallthru
      _
    // Predicated region
    $region10: #{track_builder_forward.1} parent=1 // pred_check
      _
    $region11: #{track_builder_forward.1} parent=1 // pred_check_branch
      %44 = sbr.rel (0) target = $region13
    $region12: #{track_builder_forward.1} parent=1 // pred_region
      %s46 = ssub.s32 128, 128
      %47 = vsyncadd [#allocation6], %s46
      %s49 = sshll.u32 [#allocation7], 4
      %s50 = int_to_ptr.vmem [resolvable:$true] %s49
      %52 = dma.hbm_to_vmem [thread:$0]  %s2, 128, %s50, [#allocation6]
    $region13: #{track_builder_forward.1} parent=1 // pred_fallthru
      _
    // Predicated region
    $region14: #{track_builder_forward.1} parent=1 // pred_check
      _
    $region15: #{track_builder_forward.1} parent=1 // pred_check_branch
      %54 = sbr.rel (0) target = $region17
    $region16: #{track_builder_forward.1} parent=1 // pred_region
      %s56 = ssub.s32 512, 512
      %57 = vsyncadd [#allocation9], %s56
      %s58 = sshll.u32 [#allocation8], 4
      %s59 = int_to_ptr.vmem [resolvable:$true] %s58
      %64 = dma.hbm_to_vmem [thread:$0]  %s3, 512, %s59, [#allocation9], 128, 128, 8
    $region17: #{track_builder_forward.1} parent=1 // pred_fallthru
      _
    // Predicated region
    $region18: #{track_builder_forward.1} parent=1 // pred_check
      _
    $region19: #{track_builder_forward.1} parent=1 // pred_check_branch
      %66 = sbr.rel (0) target = $region21
    $region20: #{track_builder_forward.1} parent=1 // pred_region
      %s68 = ssub.s32 256, 256
      %69 = vsyncadd [#allocation9], %s68
      %s70 = sshll.u32 [#allocation10], 4
      %s71 = int_to_ptr.vmem [resolvable:$true] %s70
      %76 = dma.hbm_to_vmem [thread:$0]  %s4, 256, %s71, [#allocation9], 128, 128, 8
    $region21: #{track_builder_forward.1} parent=1 // pred_fallthru
      _
    // Predicated region
    $region22: #{track_builder_forward.1} parent=1 // pred_check
      _
    $region23: #{track_builder_forward.1} parent=1 // pred_check_branch
      %78 = sbr.rel (0) target = $region25
    $region24: #{track_builder_forward.1} parent=1 // pred_region
      _
    $region25: #{track_builder_forward.1} parent=1 // pred_fallthru
      _
    // Predicated region
    $region26: #{track_builder_forward.1} parent=1 // pred_check
      _
    $region27: #{track_builder_forward.1} parent=1 // pred_check_branch
      %80 = sbr.rel (0) target = $region29
    $region28: #{track_builder_forward.1} parent=1 // pred_region
      _
    $region29: #{track_builder_forward.1} parent=1 // pred_fallthru
      _
    // Predicated region
    $region30: #{track_builder_forward.1} parent=1 // pred_check
      _
    $region31: #{track_builder_forward.1} parent=1 // pred_check_branch
      %82 = sbr.rel (0) target = $region33
    $region32: #{track_builder_forward.1} parent=1 // pred_region
      _
    $region33: #{track_builder_forward.1} parent=1 // pred_fallthru
      _
    // Predicated region
    $region34: #{track_builder_forward.1} parent=1 // pred_check
      _
    $region35: #{track_builder_forward.1} parent=1 // pred_check_branch
      %84 = sbr.rel (0) target = $region37
    $region36: #{track_builder_forward.1} parent=1 // pred_region
      %85 = dma.done [#allocation3], 256
    $region37: #{track_builder_forward.1} parent=1 // pred_fallthru
      _
    // Predicated region
    $region38: #{track_builder_forward.1} parent=1 // pred_check
      _
    $region39: #{track_builder_forward.1} parent=1 // pred_check_branch
      %87 = sbr.rel (0) target = $region41
    $region40: #{track_builder_forward.1} parent=1 // pred_region
      %88 = dma.done [#allocation6], 256
    $region41: #{track_builder_forward.1} parent=1 // pred_fallthru
      _
    // Predicated region
    $region42: #{track_builder_forward.1} parent=1 // pred_check
      _
    $region43: #{track_builder_forward.1} parent=1 // pred_check_branch
      %90 = sbr.rel (0) target = $region45
    $region44: #{track_builder_forward.1} parent=1 // pred_region
      %91 = dma.done [#allocation6], 128
    $region45: #{track_builder_forward.1} parent=1 // pred_fallthru
      _
    // Predicated region
    $region46: #{track_builder_forward.1} parent=1 // pred_check
      _
    $region47: #{track_builder_forward.1} parent=1 // pred_check_branch
      %93 = sbr.rel (0) target = $region49
    $region48: #{track_builder_forward.1} parent=1 // pred_region
      %94 = dma.done [#allocation9], 512
    $region49: #{track_builder_forward.1} parent=1 // pred_fallthru
      _
    // Predicated region
    $region50: #{track_builder_forward.1} parent=1 // pred_check
      _
    $region51: #{track_builder_forward.1} parent=1 // pred_check_branch
      %96 = sbr.rel (0) target = $region53
    $region52: #{track_builder_forward.1} parent=1 // pred_region
      %97 = dma.done [#allocation9], 256
    $region53: #{track_builder_forward.1} parent=1 // pred_fallthru
      _
    %v98 = vld [vmem:[#allocation2] sm:$0xff]
    %v99 = vld [vmem:[#allocation2 + $0x8] sm:$0xff]
    %v100 = vld [vmem:[#allocation8] sm:$0xff]
    %v101 = vld [vmem:[#allocation8 + $0x8] sm:$0xff]
    %v102 = vld [vmem:[#allocation8 + $0x10] sm:$0xff]
    %v103 = vld [vmem:[#allocation8 + $0x18] sm:$0xff]
    %v104 = vld [vmem:[%s6] sm:$0x1]
    %v105 = vlaneseq
    %v106 = vshrl.u32 %v105, 7
    %v107 = vsub.s32 0, %v106
    %v108 = vrot.slane %v104, %v107
    %vm109 = vcmask 261120
    %v111 = vsel %vm109, %v98, 0
    %v114 = vsel %vm109, %v99, 0
    %116 = vmatprep.subr.mxu0 0.0
    %117 = vmatpush1.msra.mxu0 %v100
    %118 = vmatprep.subr.mxu0 0.0
    %119 = vmatpush1.msra.mxu0 %v101
    %120 = vmatprep.subr.mxu0 0.0
    %121 = vmatpush1.msra.mxu0 %v102
    %122 = vmatprep.subr.mxu0 0.0
    %123 = vmatpush1.msra.mxu0 %v103
    %124 = vmatprep.subr.mxu0 0.0
    %125 = vmatpush1.msra.mxu0 0.0
    %126 = vmatprep.subr.mxu0 0.0
    %127 = vmatpush1.msra.mxu0 0.0
    %128 = vmatprep.subr.mxu0 0.0
    %129 = vmatpush1.msra.mxu0 0.0
    %130 = vmatprep.subr.mxu0 0.0
    %131 = vmatpush1.msra.mxu0 0.0
    %132 = vmatprep.subr.mxu0 0.0
    %133 = vmatpush1.msra.mxu0 0.0
    %134 = vmatprep.subr.mxu0 0.0
    %135 = vmatpush1.msra.mxu0 0.0
    %136 = vmatprep.subr.mxu0 0.0
    %137 = vmatpush1.msra.mxu0 0.0
    %138 = vmatprep.subr.mxu0 0.0
    %139 = vmatpush1.msra.mxu0 0.0
    %140 = vmatprep.subr.mxu0 0.0
    %141 = vmatpush1.msra.mxu0 0.0
    %142 = vmatprep.subr.mxu0 0.0
    %143 = vmatpush1.msra.mxu0 0.0
    %144 = vmatprep.subr.mxu0 0.0
    %145 = vmatpush1.msra.mxu0 0.0
    %146 = vmatprep.subr.mxu0 0.0
    %147 = vmatpush1.msra.mxu0 0.0
    %148 = vmatprep.subr.mxu0 0.0
    %149 = vmatpush1.msra.mxu0 0.0
    %150 = vmatprep.subr.mxu0 0.0
    %151 = vmatpush1.msra.mxu0 0.0
    %152 = vmatprep.subr.mxu0 0.0
    %153 = vmatpush1.msra.mxu0 0.0
    %154 = vmatprep.subr.mxu0 0.0
    %155 = vmatpush1.msra.mxu0 0.0
    %156 = vmatprep.subr.mxu0 0.0
    %157 = vmatpush1.msra.mxu0 0.0
    %158 = vmatprep.subr.mxu0 0.0
    %159 = vmatpush1.msra.mxu0 0.0
    %160 = vmatprep.subr.mxu0 0.0
    %161 = vmatpush1.msra.mxu0 0.0
    %162 = vmatprep.subr.mxu0 0.0
    %163 = vmatpush1.msra.mxu0 0.0
    %164 = vmatprep.subr.mxu0 0.0
    %165 = vmatpush1.msra.mxu0 0.0
    %166 = vmatprep.subr.mxu0 0.0
    %167 = vmatpush1.msra.mxu0 0.0
    %168 = vmatprep.subr.mxu0 0.0
    %169 = vmatpush1.msra.mxu0 0.0
    %170 = vmatprep.subr.mxu0 0.0
    %171 = vmatpush1.msra.mxu0 0.0
    %172 = vmatprep.subr.mxu0 0.0
    %173 = vmatpush1.msra.mxu0 0.0
    %174 = vmatprep.subr.mxu0 0.0
    %175 = vmatpush1.msra.mxu0 0.0
    %176 = vmatprep.subr.mxu0 0.0
    %177 = vmatpush1.msra.mxu0 0.0
    %178 = vmatprep.subr.mxu0 0.0
    %179 = vmatpush1.msra.mxu0 0.0
    %180 = vmatprep.mubr.f32.mxu0 0.0
    %181 = vmatmul.mubr.f32.gmra.mrb[0].mxu0 %v111
    %v182 = vpop.f32.mrb[0].mxu0
    %v183 = vadd.f32 %v108, %v182
    %v184 = vpop.f32.mrb[0].mxu0
    %185 = vmatprep.mubr.f32.mxu0 0.0
    %186 = vmatmul.mubr.f32.gmra.mrb[0].mxu0 %v114
    %v187 = vpop.f32.mrb[0].mxu0
    %v188 = vadd.f32 %v108, %v187
    %v189 = vpop.f32.mrb[0].mxu0
    %190 = vdwg.mxu0
    %v191 = vld [vmem:[#allocation5] sm:$0xff]
    %v192 = vld [vmem:[#allocation5 + $0x8] sm:$0xff]
    %v193 = vld [vmem:[#allocation10] sm:$0xff]
    %v194 = vld [vmem:[#allocation10 + $0x8] sm:$0xff]
    %v195 = vld [vmem:[%s6 + $0x1] sm:$0x1]
    %v196 = vlaneseq
    %v197 = vshrl.u32 %v196, 7
    %v198 = vsub.s32 0, %v197
    %v199 = vrot.slane %v195, %v198
    %vm200 = vcmask 130048
    %v202 = vsel %vm200, %v191, 0
    %v205 = vsel %vm200, %v192, 0
    %207 = vmatprep.subr.mxu0 0.0
    %208 = vmatpush1.msra.mxu0 %v193
    %209 = vmatprep.subr.mxu0 0.0
    %210 = vmatpush1.msra.mxu0 %v194
    %211 = vmatprep.subr.mxu0 0.0
    %212 = vmatpush1.msra.mxu0 0.0
    %213 = vmatprep.subr.mxu0 0.0
    %214 = vmatpush1.msra.mxu0 0.0
    %215 = vmatprep.subr.mxu0 0.0
    %216 = vmatpush1.msra.mxu0 0.0
    %217 = vmatprep.subr.mxu0 0.0
    %218 = vmatpush1.msra.mxu0 0.0
    %219 = vmatprep.subr.mxu0 0.0
    %220 = vmatpush1.msra.mxu0 0.0
    %221 = vmatprep.subr.mxu0 0.0
    %222 = vmatpush1.msra.mxu0 0.0
    %223 = vmatprep.subr.mxu0 0.0
    %224 = vmatpush1.msra.mxu0 0.0
    %225 = vmatprep.subr.mxu0 0.0
    %226 = vmatpush1.msra.mxu0 0.0
    %227 = vmatprep.subr.mxu0 0.0
    %228 = vmatpush1.msra.mxu0 0.0
    %229 = vmatprep.subr.mxu0 0.0
    %230 = vmatpush1.msra.mxu0 0.0
    %231 = vmatprep.subr.mxu0 0.0
    %232 = vmatpush1.msra.mxu0 0.0
    %233 = vmatprep.subr.mxu0 0.0
    %234 = vmatpush1.msra.mxu0 0.0
    %235 = vmatprep.subr.mxu0 0.0
    %236 = vmatpush1.msra.mxu0 0.0
    %237 = vmatprep.subr.mxu0 0.0
    %238 = vmatpush1.msra.mxu0 0.0
    %239 = vmatprep.subr.mxu0 0.0
    %240 = vmatpush1.msra.mxu0 0.0
    %241 = vmatprep.subr.mxu0 0.0
    %242 = vmatpush1.msra.mxu0 0.0
    %243 = vmatprep.subr.mxu0 0.0
    %244 = vmatpush1.msra.mxu0 0.0
    %245 = vmatprep.subr.mxu0 0.0
    %246 = vmatpush1.msra.mxu0 0.0
    %247 = vmatprep.subr.mxu0 0.0
    %248 = vmatpush1.msra.mxu0 0.0
    %249 = vmatprep.subr.mxu0 0.0
    %250 = vmatpush1.msra.mxu0 0.0
    %251 = vmatprep.subr.mxu0 0.0
    %252 = vmatpush1.msra.mxu0 0.0
    %253 = vmatprep.subr.mxu0 0.0
    %254 = vmatpush1.msra.mxu0 0.0
    %255 = vmatprep.subr.mxu0 0.0
    %256 = vmatpush1.msra.mxu0 0.0
    %257 = vmatprep.subr.mxu0 0.0
    %258 = vmatpush1.msra.mxu0 0.0
    %259 = vmatprep.subr.mxu0 0.0
    %260 = vmatpush1.msra.mxu0 0.0
    %261 = vmatprep.subr.mxu0 0.0
    %262 = vmatpush1.msra.mxu0 0.0
    %263 = vmatprep.subr.mxu0 0.0
    %264 = vmatpush1.msra.mxu0 0.0
    %265 = vmatprep.subr.mxu0 0.0
    %266 = vmatpush1.msra.mxu0 0.0
    %267 = vmatprep.subr.mxu0 0.0
    %268 = vmatpush1.msra.mxu0 0.0
    %269 = vmatprep.subr.mxu0 0.0
    %270 = vmatpush1.msra.mxu0 0.0
    %271 = vmatprep.mubr.f32.mxu0 0.0
    %272 = vmatmul.mubr.f32.gmra.mrb[0].mxu0 %v202
    %v273 = vpop.f32.mrb[0].mxu0
    %v274 = vadd.f32 %v199, %v273
    %v275 = vpop.f32.mrb[0].mxu0
    %276 = vmatprep.mubr.f32.mxu0 0.0
    %277 = vmatmul.mubr.f32.gmra.mrb[0].mxu0 %v205
    %v278 = vpop.f32.mrb[0].mxu0
    %v279 = vadd.f32 %v199, %v278
    %v280 = vpop.f32.mrb[0].mxu0
    %281 = vdwg.mxu0
    %v282 = vld [vmem:[#allocation7] sm:$0xff]
    %v283 = vld [vmem:[%s5] sm:$0xff]
    %v284 = vld [vmem:[%s5 + $0x8] sm:$0xff]
    %v285 = vld [vmem:[%s6 + $0x2] sm:$0x1]
    %v286 = vlaneseq
    %v287 = vshrl.u32 %v286, 7
    %v288 = vsub.s32 0, %v287
    %v289 = vrot.slane %v285, %v288
    %v291 = vsel %vm200, %v282, 0
    %293 = vmatprep.subr.mxu0 0.0
    %294 = vmatpush1.msra.mxu0 %v283
    %295 = vmatprep.subr.mxu0 0.0
    %296 = vmatpush1.msra.mxu0 %v284
    %297 = vmatprep.subr.mxu0 0.0
    %298 = vmatpush1.msra.mxu0 0.0
    %299 = vmatprep.subr.mxu0 0.0
    %300 = vmatpush1.msra.mxu0 0.0
    %301 = vmatprep.subr.mxu0 0.0
    %302 = vmatpush1.msra.mxu0 0.0
    %303 = vmatprep.subr.mxu0 0.0
    %304 = vmatpush1.msra.mxu0 0.0
    %305 = vmatprep.subr.mxu0 0.0
    %306 = vmatpush1.msra.mxu0 0.0
    %307 = vmatprep.subr.mxu0 0.0
    %308 = vmatpush1.msra.mxu0 0.0
    %309 = vmatprep.subr.mxu0 0.0
    %310 = vmatpush1.msra.mxu0 0.0
    %311 = vmatprep.subr.mxu0 0.0
    %312 = vmatpush1.msra.mxu0 0.0
    %313 = vmatprep.subr.mxu0 0.0
    %314 = vmatpush1.msra.mxu0 0.0
    %315 = vmatprep.subr.mxu0 0.0
    %316 = vmatpush1.msra.mxu0 0.0
    %317 = vmatprep.subr.mxu0 0.0
    %318 = vmatpush1.msra.mxu0 0.0
    %319 = vmatprep.subr.mxu0 0.0
    %320 = vmatpush1.msra.mxu0 0.0
    %321 = vmatprep.subr.mxu0 0.0
    %322 = vmatpush1.msra.mxu0 0.0
    %323 = vmatprep.subr.mxu0 0.0
    %324 = vmatpush1.msra.mxu0 0.0
    %325 = vmatprep.subr.mxu0 0.0
    %326 = vmatpush1.msra.mxu0 0.0
    %327 = vmatprep.subr.mxu0 0.0
    %328 = vmatpush1.msra.mxu0 0.0
    %329 = vmatprep.subr.mxu0 0.0
    %330 = vmatpush1.msra.mxu0 0.0
    %331 = vmatprep.subr.mxu0 0.0
    %332 = vmatpush1.msra.mxu0 0.0
    %333 = vmatprep.subr.mxu0 0.0
    %334 = vmatpush1.msra.mxu0 0.0
    %335 = vmatprep.subr.mxu0 0.0
    %336 = vmatpush1.msra.mxu0 0.0
    %337 = vmatprep.subr.mxu0 0.0
    %338 = vmatpush1.msra.mxu0 0.0
    %339 = vmatprep.subr.mxu0 0.0
    %340 = vmatpush1.msra.mxu0 0.0
    %341 = vmatprep.subr.mxu0 0.0
    %342 = vmatpush1.msra.mxu0 0.0
    %343 = vmatprep.subr.mxu0 0.0
    %344 = vmatpush1.msra.mxu0 0.0
    %345 = vmatprep.subr.mxu0 0.0
    %346 = vmatpush1.msra.mxu0 0.0
    %347 = vmatprep.subr.mxu0 0.0
    %348 = vmatpush1.msra.mxu0 0.0
    %349 = vmatprep.subr.mxu0 0.0
    %350 = vmatpush1.msra.mxu0 0.0
    %351 = vmatprep.subr.mxu0 0.0
    %352 = vmatpush1.msra.mxu0 0.0
    %353 = vmatprep.subr.mxu0 0.0
    %354 = vmatpush1.msra.mxu0 0.0
    %355 = vmatprep.subr.mxu0 0.0
    %356 = vmatpush1.msra.mxu0 0.0
    %357 = vmatprep.mubr.f32.mxu0 0.0
    %358 = vmatmul.mubr.f32.gmra.mrb[0].mxu0 %v291
    %v359 = vpop.f32.mrb[0].mxu0
    %v360 = vadd.f32 %v289, %v359
    %v361 = vpop.f32.mrb[0].mxu0
    %362 = vdwg.mxu0
    %365 = vrot.lane.b32.xlu0 %v274, 96
    %v366 = vpop.permute.xlu0 %365
    %367 = vrot.lane.b32.xlu0 %v279, 96
    %v368 = vpop.permute.xlu0 %367
    %369 = vrot.lane.b32.xlu0 %v274, 64
    %v370 = vpop.permute.xlu0 %369
    %371 = vrot.lane.b32.xlu0 %v279, 64
    %v372 = vpop.permute.xlu0 %371
    %373 = vrot.lane.b32.xlu0 %v274, 32
    %v374 = vpop.permute.xlu0 %373
    %375 = vrot.lane.b32.xlu0 %v279, 32
    %v376 = vpop.permute.xlu0 %375
    %378 = vrot.lane.b32.xlu0 %v360, 96
    %v379 = vpop.permute.xlu0 %378
    %380 = vrot.lane.b32.xlu0 %v360, 64
    %v381 = vpop.permute.xlu0 %380
    %382 = vrot.lane.b32.xlu0 %v360, 32
    %v383 = vpop.permute.xlu0 %382
    %v384 = vsel %vm109, %v360, 0
    %v386 = vsel %vm109, %v274, 0
    %v388 = vsel %vm109, %v279, 0
    %390 = vmatprep.subr.mxu0 0.0
    %391 = vmatpush1.xpose.msra.mxu0 %v386
    %392 = vmatprep.subr.mxu0 0.0
    %393 = vmatpush1.xpose.msra.mxu0 %v388
    %394 = vmatprep.subr.mxu0 0.0
    %395 = vmatpush1.xpose.msra.mxu0 0.0
    %396 = vmatprep.subr.mxu0 0.0
    %397 = vmatpush1.xpose.msra.mxu0 0.0
    %398 = vmatprep.subr.mxu0 0.0
    %399 = vmatpush1.xpose.msra.mxu0 0.0
    %400 = vmatprep.subr.mxu0 0.0
    %401 = vmatpush1.xpose.msra.mxu0 0.0
    %402 = vmatprep.subr.mxu0 0.0
    %403 = vmatpush1.xpose.msra.mxu0 0.0
    %404 = vmatprep.subr.mxu0 0.0
    %405 = vmatpush1.xpose.msra.mxu0 0.0
    %406 = vmatprep.subr.mxu0 0.0
    %407 = vmatpush1.xpose.msra.mxu0 0.0
    %408 = vmatprep.subr.mxu0 0.0
    %409 = vmatpush1.xpose.msra.mxu0 0.0
    %410 = vmatprep.subr.mxu0 0.0
    %411 = vmatpush1.xpose.msra.mxu0 0.0
    %412 = vmatprep.subr.mxu0 0.0
    %413 = vmatpush1.xpose.msra.mxu0 0.0
    %414 = vmatprep.subr.mxu0 0.0
    %415 = vmatpush1.xpose.msra.mxu0 0.0
    %416 = vmatprep.subr.mxu0 0.0
    %417 = vmatpush1.xpose.msra.mxu0 0.0
    %418 = vmatprep.subr.mxu0 0.0
    %419 = vmatpush1.xpose.msra.mxu0 0.0
    %420 = vmatprep.subr.mxu0 0.0
    %421 = vmatpush1.xpose.msra.mxu0 0.0
    %422 = vmatprep.subr.mxu0 0.0
    %423 = vmatpush1.xpose.msra.mxu0 0.0
    %424 = vmatprep.subr.mxu0 0.0
    %425 = vmatpush1.xpose.msra.mxu0 0.0
    %426 = vmatprep.subr.mxu0 0.0
    %427 = vmatpush1.xpose.msra.mxu0 0.0
    %428 = vmatprep.subr.mxu0 0.0
    %429 = vmatpush1.xpose.msra.mxu0 0.0
    %430 = vmatprep.subr.mxu0 0.0
    %431 = vmatpush1.xpose.msra.mxu0 0.0
    %432 = vmatprep.subr.mxu0 0.0
    %433 = vmatpush1.xpose.msra.mxu0 0.0
    %434 = vmatprep.subr.mxu0 0.0
    %435 = vmatpush1.xpose.msra.mxu0 0.0
    %436 = vmatprep.subr.mxu0 0.0
    %437 = vmatpush1.xpose.msra.mxu0 0.0
    %438 = vmatprep.subr.mxu0 0.0
    %439 = vmatpush1.xpose.msra.mxu0 0.0
    %440 = vmatprep.subr.mxu0 0.0
    %441 = vmatpush1.xpose.msra.mxu0 0.0
    %442 = vmatprep.subr.mxu0 0.0
    %443 = vmatpush1.xpose.msra.mxu0 0.0
    %444 = vmatprep.subr.mxu0 0.0
    %445 = vmatpush1.xpose.msra.mxu0 0.0
    %446 = vmatprep.subr.mxu0 0.0
    %447 = vmatpush1.xpose.msra.mxu0 0.0
    %448 = vmatprep.subr.mxu0 0.0
    %449 = vmatpush1.xpose.msra.mxu0 0.0
    %450 = vmatprep.subr.mxu0 0.0
    %451 = vmatpush1.xpose.msra.mxu0 0.0
    %452 = vmatprep.subr.mxu0 0.0
    %453 = vmatpush1.xpose.msra.mxu0 0.0
    %454 = vmatprep.mubr.f32.mxu0 0.0
    %455 = vmatmul.mubr.f32.gmra.mrb[0].mxu0 %v384
    %v456 = vpop.f32.mrb[0].mxu0
    %v457 = vadd.f32 0.0, %v456
    %v458 = vpop.f32.mrb[0].mxu0
    %459 = vdwg.mxu0
    %v460 = vsel %vm109, %v379, 0
    %v462 = vsel %vm109, %v366, 0
    %v464 = vsel %vm109, %v368, 0
    %466 = vmatprep.subr.mxu0 0.0
    %467 = vmatpush1.xpose.msra.mxu0 %v462
    %468 = vmatprep.subr.mxu0 0.0
    %469 = vmatpush1.xpose.msra.mxu0 %v464
    %470 = vmatprep.subr.mxu0 0.0
    %471 = vmatpush1.xpose.msra.mxu0 0.0
    %472 = vmatprep.subr.mxu0 0.0
    %473 = vmatpush1.xpose.msra.mxu0 0.0
    %474 = vmatprep.subr.mxu0 0.0
    %475 = vmatpush1.xpose.msra.mxu0 0.0
    %476 = vmatprep.subr.mxu0 0.0
    %477 = vmatpush1.xpose.msra.mxu0 0.0
    %478 = vmatprep.subr.mxu0 0.0
    %479 = vmatpush1.xpose.msra.mxu0 0.0
    %480 = vmatprep.subr.mxu0 0.0
    %481 = vmatpush1.xpose.msra.mxu0 0.0
    %482 = vmatprep.subr.mxu0 0.0
    %483 = vmatpush1.xpose.msra.mxu0 0.0
    %484 = vmatprep.subr.mxu0 0.0
    %485 = vmatpush1.xpose.msra.mxu0 0.0
    %486 = vmatprep.subr.mxu0 0.0
    %487 = vmatpush1.xpose.msra.mxu0 0.0
    %488 = vmatprep.subr.mxu0 0.0
    %489 = vmatpush1.xpose.msra.mxu0 0.0
    %490 = vmatprep.subr.mxu0 0.0
    %491 = vmatpush1.xpose.msra.mxu0 0.0
    %492 = vmatprep.subr.mxu0 0.0
    %493 = vmatpush1.xpose.msra.mxu0 0.0
    %494 = vmatprep.subr.mxu0 0.0
    %495 = vmatpush1.xpose.msra.mxu0 0.0
    %496 = vmatprep.subr.mxu0 0.0
    %497 = vmatpush1.xpose.msra.mxu0 0.0
    %498 = vmatprep.subr.mxu0 0.0
    %499 = vmatpush1.xpose.msra.mxu0 0.0
    %500 = vmatprep.subr.mxu0 0.0
    %501 = vmatpush1.xpose.msra.mxu0 0.0
    %502 = vmatprep.subr.mxu0 0.0
    %503 = vmatpush1.xpose.msra.mxu0 0.0
    %504 = vmatprep.subr.mxu0 0.0
    %505 = vmatpush1.xpose.msra.mxu0 0.0
    %506 = vmatprep.subr.mxu0 0.0
    %507 = vmatpush1.xpose.msra.mxu0 0.0
    %508 = vmatprep.subr.mxu0 0.0
    %509 = vmatpush1.xpose.msra.mxu0 0.0
    %510 = vmatprep.subr.mxu0 0.0
    %511 = vmatpush1.xpose.msra.mxu0 0.0
    %512 = vmatprep.subr.mxu0 0.0
    %513 = vmatpush1.xpose.msra.mxu0 0.0
    %514 = vmatprep.subr.mxu0 0.0
    %515 = vmatpush1.xpose.msra.mxu0 0.0
    %516 = vmatprep.subr.mxu0 0.0
    %517 = vmatpush1.xpose.msra.mxu0 0.0
    %518 = vmatprep.subr.mxu0 0.0
    %519 = vmatpush1.xpose.msra.mxu0 0.0
    %520 = vmatprep.subr.mxu0 0.0
    %521 = vmatpush1.xpose.msra.mxu0 0.0
    %522 = vmatprep.subr.mxu0 0.0
    %523 = vmatpush1.xpose.msra.mxu0 0.0
    %524 = vmatprep.subr.mxu0 0.0
    %525 = vmatpush1.xpose.msra.mxu0 0.0
    %526 = vmatprep.subr.mxu0 0.0
    %527 = vmatpush1.xpose.msra.mxu0 0.0
    %528 = vmatprep.subr.mxu0 0.0
    %529 = vmatpush1.xpose.msra.mxu0 0.0
    %530 = vmatprep.mubr.f32.mxu0 0.0
    %531 = vmatmul.mubr.f32.gmra.mrb[0].mxu0 %v460
    %v532 = vpop.f32.mrb[0].mxu0
    %v533 = vadd.f32 0.0, %v532
    %v534 = vpop.f32.mrb[0].mxu0
    %535 = vdwg.mxu0
    %v536 = vsel %vm109, %v381, 0
    %v538 = vsel %vm109, %v370, 0
    %v540 = vsel %vm109, %v372, 0
    %542 = vmatprep.subr.mxu0 0.0
    %543 = vmatpush1.xpose.msra.mxu0 %v538
    %544 = vmatprep.subr.mxu0 0.0
    %545 = vmatpush1.xpose.msra.mxu0 %v540
    %546 = vmatprep.subr.mxu0 0.0
    %547 = vmatpush1.xpose.msra.mxu0 0.0
    %548 = vmatprep.subr.mxu0 0.0
    %549 = vmatpush1.xpose.msra.mxu0 0.0
    %550 = vmatprep.subr.mxu0 0.0
    %551 = vmatpush1.xpose.msra.mxu0 0.0
    %552 = vmatprep.subr.mxu0 0.0
    %553 = vmatpush1.xpose.msra.mxu0 0.0
    %554 = vmatprep.subr.mxu0 0.0
    %555 = vmatpush1.xpose.msra.mxu0 0.0
    %556 = vmatprep.subr.mxu0 0.0
    %557 = vmatpush1.xpose.msra.mxu0 0.0
    %558 = vmatprep.subr.mxu0 0.0
    %559 = vmatpush1.xpose.msra.mxu0 0.0
    %560 = vmatprep.subr.mxu0 0.0
    %561 = vmatpush1.xpose.msra.mxu0 0.0
    %562 = vmatprep.subr.mxu0 0.0
    %563 = vmatpush1.xpose.msra.mxu0 0.0
    %564 = vmatprep.subr.mxu0 0.0
    %565 = vmatpush1.xpose.msra.mxu0 0.0
    %566 = vmatprep.subr.mxu0 0.0
    %567 = vmatpush1.xpose.msra.mxu0 0.0
    %568 = vmatprep.subr.mxu0 0.0
    %569 = vmatpush1.xpose.msra.mxu0 0.0
    %570 = vmatprep.subr.mxu0 0.0
    %571 = vmatpush1.xpose.msra.mxu0 0.0
    %572 = vmatprep.subr.mxu0 0.0
    %573 = vmatpush1.xpose.msra.mxu0 0.0
    %574 = vmatprep.subr.mxu0 0.0
    %575 = vmatpush1.xpose.msra.mxu0 0.0
    %576 = vmatprep.subr.mxu0 0.0
    %577 = vmatpush1.xpose.msra.mxu0 0.0
    %578 = vmatprep.subr.mxu0 0.0
    %579 = vmatpush1.xpose.msra.mxu0 0.0
    %580 = vmatprep.subr.mxu0 0.0
    %581 = vmatpush1.xpose.msra.mxu0 0.0
    %582 = vmatprep.subr.mxu0 0.0
    %583 = vmatpush1.xpose.msra.mxu0 0.0
    %584 = vmatprep.subr.mxu0 0.0
    %585 = vmatpush1.xpose.msra.mxu0 0.0
    %586 = vmatprep.subr.mxu0 0.0
    %587 = vmatpush1.xpose.msra.mxu0 0.0
    %588 = vmatprep.subr.mxu0 0.0
    %589 = vmatpush1.xpose.msra.mxu0 0.0
    %590 = vmatprep.subr.mxu0 0.0
    %591 = vmatpush1.xpose.msra.mxu0 0.0
    %592 = vmatprep.subr.mxu0 0.0
    %593 = vmatpush1.xpose.msra.mxu0 0.0
    %594 = vmatprep.subr.mxu0 0.0
    %595 = vmatpush1.xpose.msra.mxu0 0.0
    %596 = vmatprep.subr.mxu0 0.0
    %597 = vmatpush1.xpose.msra.mxu0 0.0
    %598 = vmatprep.subr.mxu0 0.0
    %599 = vmatpush1.xpose.msra.mxu0 0.0
    %600 = vmatprep.subr.mxu0 0.0
    %601 = vmatpush1.xpose.msra.mxu0 0.0
    %602 = vmatprep.subr.mxu0 0.0
    %603 = vmatpush1.xpose.msra.mxu0 0.0
    %604 = vmatprep.subr.mxu0 0.0
    %605 = vmatpush1.xpose.msra.mxu0 0.0
    %606 = vmatprep.mubr.f32.mxu0 0.0
    %607 = vmatmul.mubr.f32.gmra.mrb[0].mxu0 %v536
    %v608 = vpop.f32.mrb[0].mxu0
    %v609 = vadd.f32 0.0, %v608
    %v610 = vpop.f32.mrb[0].mxu0
    %611 = vdwg.mxu0
    %v612 = vsel %vm109, %v383, 0
    %v614 = vsel %vm109, %v374, 0
    %v616 = vsel %vm109, %v376, 0
    %618 = vmatprep.subr.mxu0 0.0
    %619 = vmatpush1.xpose.msra.mxu0 %v614
    %620 = vmatprep.subr.mxu0 0.0
    %621 = vmatpush1.xpose.msra.mxu0 %v616
    %622 = vmatprep.subr.mxu0 0.0
    %623 = vmatpush1.xpose.msra.mxu0 0.0
    %624 = vmatprep.subr.mxu0 0.0
    %625 = vmatpush1.xpose.msra.mxu0 0.0
    %626 = vmatprep.subr.mxu0 0.0
    %627 = vmatpush1.xpose.msra.mxu0 0.0
    %628 = vmatprep.subr.mxu0 0.0
    %629 = vmatpush1.xpose.msra.mxu0 0.0
    %630 = vmatprep.subr.mxu0 0.0
    %631 = vmatpush1.xpose.msra.mxu0 0.0
    %632 = vmatprep.subr.mxu0 0.0
    %633 = vmatpush1.xpose.msra.mxu0 0.0
    %634 = vmatprep.subr.mxu0 0.0
    %635 = vmatpush1.xpose.msra.mxu0 0.0
    %636 = vmatprep.subr.mxu0 0.0
    %637 = vmatpush1.xpose.msra.mxu0 0.0
    %638 = vmatprep.subr.mxu0 0.0
    %639 = vmatpush1.xpose.msra.mxu0 0.0
    %640 = vmatprep.subr.mxu0 0.0
    %641 = vmatpush1.xpose.msra.mxu0 0.0
    %642 = vmatprep.subr.mxu0 0.0
    %643 = vmatpush1.xpose.msra.mxu0 0.0
    %644 = vmatprep.subr.mxu0 0.0
    %645 = vmatpush1.xpose.msra.mxu0 0.0
    %646 = vmatprep.subr.mxu0 0.0
    %647 = vmatpush1.xpose.msra.mxu0 0.0
    %648 = vmatprep.subr.mxu0 0.0
    %649 = vmatpush1.xpose.msra.mxu0 0.0
    %650 = vmatprep.subr.mxu0 0.0
    %651 = vmatpush1.xpose.msra.mxu0 0.0
    %652 = vmatprep.subr.mxu0 0.0
    %653 = vmatpush1.xpose.msra.mxu0 0.0
    %654 = vmatprep.subr.mxu0 0.0
    %655 = vmatpush1.xpose.msra.mxu0 0.0
    %656 = vmatprep.subr.mxu0 0.0
    %657 = vmatpush1.xpose.msra.mxu0 0.0
    %658 = vmatprep.subr.mxu0 0.0
    %659 = vmatpush1.xpose.msra.mxu0 0.0
    %660 = vmatprep.subr.mxu0 0.0
    %661 = vmatpush1.xpose.msra.mxu0 0.0
    %662 = vmatprep.subr.mxu0 0.0
    %663 = vmatpush1.xpose.msra.mxu0 0.0
    %664 = vmatprep.subr.mxu0 0.0
    %665 = vmatpush1.xpose.msra.mxu0 0.0
    %666 = vmatprep.subr.mxu0 0.0
    %667 = vmatpush1.xpose.msra.mxu0 0.0
    %668 = vmatprep.subr.mxu0 0.0
    %669 = vmatpush1.xpose.msra.mxu0 0.0
    %670 = vmatprep.subr.mxu0 0.0
    %671 = vmatpush1.xpose.msra.mxu0 0.0
    %672 = vmatprep.subr.mxu0 0.0
    %673 = vmatpush1.xpose.msra.mxu0 0.0
    %674 = vmatprep.subr.mxu0 0.0
    %675 = vmatpush1.xpose.msra.mxu0 0.0
    %676 = vmatprep.subr.mxu0 0.0
    %677 = vmatpush1.xpose.msra.mxu0 0.0
    %678 = vmatprep.subr.mxu0 0.0
    %679 = vmatpush1.xpose.msra.mxu0 0.0
    %680 = vmatprep.subr.mxu0 0.0
    %681 = vmatpush1.xpose.msra.mxu0 0.0
    %682 = vmatprep.mubr.f32.mxu0 0.0
    %683 = vmatmul.mubr.f32.gmra.mrb[0].mxu0 %v612
    %v684 = vpop.f32.mrb[0].mxu0
    %v685 = vadd.f32 0.0, %v684
    %v686 = vpop.f32.mrb[0].mxu0
    %687 = vdwg.mxu0
    %v688 = vsel %vm200, %v457, -inf
    %v689 = vrot.slane %v688, 4
    %v690 = vmax.f32 %v688, %v689
    %v691 = vrot.slane %v690, 2
    %v692 = vmax.f32 %v690, %v691
    %v693 = vrot.slane %v692, 1
    %v694 = vmax.f32 %v692, %v693
    %v695 = vsel %vm200, %v533, -inf
    %v696 = vrot.slane %v695, 4
    %v697 = vmax.f32 %v695, %v696
    %v698 = vrot.slane %v697, 2
    %v699 = vmax.f32 %v697, %v698
    %v700 = vrot.slane %v699, 1
    %v701 = vmax.f32 %v699, %v700
    %v702 = vsel %vm200, %v609, -inf
    %v703 = vrot.slane %v702, 4
    %v704 = vmax.f32 %v702, %v703
    %v705 = vrot.slane %v704, 2
    %v706 = vmax.f32 %v704, %v705
    %v707 = vrot.slane %v706, 1
    %v708 = vmax.f32 %v706, %v707
    %v709 = vsel %vm200, %v685, -inf
    %v710 = vrot.slane %v709, 4
    %v711 = vmax.f32 %v709, %v710
    %v712 = vrot.slane %v711, 2
    %v713 = vmax.f32 %v711, %v712
    %v714 = vrot.slane %v713, 1
    %v715 = vmax.f32 %v713, %v714
    %v716 = vsub.f32 %v457, %v694
    %v717 = vsub.f32 %v533, %v701
    %v718 = vsub.f32 %v609, %v708
    %v719 = vsub.f32 %v685, %v715
    %v720 = vmul.f32 %v716, 1.442695
    %v721 = vpow.pop %v720
    %v722 = vmul.f32 %v717, 1.442695
    %v723 = vpow.pop %v722
    %v724 = vmul.f32 %v718, 1.442695
    %v725 = vpow.pop %v724
    %v726 = vmul.f32 %v719, 1.442695
    %v727 = vpow.pop %v726
    %v728 = vsel %vm200, %v721, 0.0
    %v729 = vrot.slane %v728, 4
    %v730 = vadd.f32 %v728, %v729
    %v731 = vrot.slane %v730, 2
    %v732 = vadd.f32 %v730, %v731
    %v733 = vrot.slane %v732, 1
    %v734 = vadd.f32 %v732, %v733
    %v735 = vsel %vm200, %v723, 0.0
    %v736 = vrot.slane %v735, 4
    %v737 = vadd.f32 %v735, %v736
    %v738 = vrot.slane %v737, 2
    %v739 = vadd.f32 %v737, %v738
    %v740 = vrot.slane %v739, 1
    %v741 = vadd.f32 %v739, %v740
    %v742 = vsel %vm200, %v725, 0.0
    %v743 = vrot.slane %v742, 4
    %v744 = vadd.f32 %v742, %v743
    %v745 = vrot.slane %v744, 2
    %v746 = vadd.f32 %v744, %v745
    %v747 = vrot.slane %v746, 1
    %v748 = vadd.f32 %v746, %v747
    %v749 = vsel %vm200, %v727, 0.0
    %v750 = vrot.slane %v749, 4
    %v751 = vadd.f32 %v749, %v750
    %v752 = vrot.slane %v751, 2
    %v753 = vadd.f32 %v751, %v752
    %v754 = vrot.slane %v753, 1
    %v755 = vadd.f32 %v753, %v754
    %v756 = vrcp.pop %v734
    %v757 = vrcp.pop %v741
    %v758 = vrcp.pop %v748
    %v759 = vrcp.pop %v755
    %v760 = vmul.f32 %v721, %v756
    %v761 = vmul.f32 %v723, %v757
    %v762 = vmul.f32 %v725, %v758
    %v763 = vmul.f32 %v727, %v759
    %v764 = vsel %vm200, %v760, 0.0
    %v765 = vsel %vm200, %v761, 0.0
    %v766 = vadd.f32 %v764, %v765
    %v767 = vsel %vm200, %v762, 0.0
    %v768 = vadd.f32 %v766, %v767
    %v769 = vsel %vm200, %v763, 0.0
    %v770 = vadd.f32 %v768, %v769
    %771 = vxpose.xlu0.b32.start [1/16] %v770, 128
    %772 = vxpose.xlu0.b32.cont [2/16] 0.0, 128
    %773 = vxpose.xlu0.b32.cont [3/16] 0.0, 128
    %774 = vxpose.xlu0.b32.cont [4/16] 0.0, 128
    %775 = vxpose.xlu0.b32.cont [5/16] 0.0, 128
    %776 = vxpose.xlu0.b32.cont [6/16] 0.0, 128
    %777 = vxpose.xlu0.b32.cont [7/16] 0.0, 128
    %778 = vxpose.xlu0.b32.cont [8/16] 0.0, 128
    %779 = vxpose.xlu0.b32.cont [9/16] 0.0, 128
    %780 = vxpose.xlu0.b32.cont [10/16] 0.0, 128
    %781 = vxpose.xlu0.b32.cont [11/16] 0.0, 128
    %782 = vxpose.xlu0.b32.cont [12/16] 0.0, 128
    %783 = vxpose.xlu0.b32.cont [13/16] 0.0, 128
    %784 = vxpose.xlu0.b32.cont [14/16] 0.0, 128
    %785 = vxpose.xlu0.b32.cont [15/16] 0.0, 128
    %786 = vxpose.xlu0.b32.end [16/16] 0.0, 128
    %v787 = vpop.trf.xlu0
    %v788 = vpop.trf.xlu0
    %v789 = vpop.trf.xlu0
    %v790 = vpop.trf.xlu0
    %v791 = vpop.trf.xlu0
    %v792 = vpop.trf.xlu0
    %v793 = vpop.trf.xlu0
    %v794 = vpop.trf.xlu0
    %v795 = vpop.trf.xlu0
    %v796 = vpop.trf.xlu0
    %v797 = vpop.trf.xlu0
    %v798 = vpop.trf.xlu0
    %v799 = vpop.trf.xlu0
    %v800 = vpop.trf.xlu0
    %v801 = vpop.trf.xlu0
    %v802 = vpop.trf.xlu0
    %v803 = vmul.f32 %v787, 0.25
    %v804 = vmul.f32 %v788, 0.25
    %vm805 = vcmask 64512
    %806 = vst.msk [vmem:[%s9] sm:$0xff] %vm805, %v803
    %807 = vst.msk [vmem:[%s9 + $0x8] sm:$0xff] %vm805, %v804
    %v808 = vadd.f32 %v760, 1e-06
    %v809 = vadd.f32 %v761, 1e-06
    %v810 = vadd.f32 %v762, 1e-06
    %v811 = vadd.f32 %v763, 1e-06
    %v812 = vlog2.pop %v808
    %v813 = vmul.f32 %v812, 0.6931472
    %v814 = vlog2.pop %v809
    %v815 = vmul.f32 %v814, 0.6931472
    %v816 = vlog2.pop %v810
    %v817 = vmul.f32 %v816, 0.6931472
    %v818 = vlog2.pop %v811
    %v819 = vmul.f32 %v818, 0.6931472
    %v820 = vmul.f32 %v760, %v813
    %v821 = vmul.f32 %v761, %v815
    %v822 = vmul.f32 %v762, %v817
    %v823 = vmul.f32 %v763, %v819
    %v824 = vsel %vm200, %v820, 0.0
    %v825 = vrot.slane %v824, 4
    %v826 = vadd.f32 %v824, %v825
    %v827 = vrot.slane %v826, 2
    %v828 = vadd.f32 %v826, %v827
    %v829 = vrot.slane %v828, 1
    %v830 = vadd.f32 %v828, %v829
    %v831 = vsel %vm200, %v821, 0.0
    %v832 = vrot.slane %v831, 4
    %v833 = vadd.f32 %v831, %v832
    %v834 = vrot.slane %v833, 2
    %v835 = vadd.f32 %v833, %v834
    %v836 = vrot.slane %v835, 1
    %v837 = vadd.f32 %v835, %v836
    %v838 = vsel %vm200, %v822, 0.0
    %v839 = vrot.slane %v838, 4
    %v840 = vadd.f32 %v838, %v839
    %v841 = vrot.slane %v840, 2
    %v842 = vadd.f32 %v840, %v841
    %v843 = vrot.slane %v842, 1
    %v844 = vadd.f32 %v842, %v843
    %v845 = vsel %vm200, %v823, 0.0
    %v846 = vrot.slane %v845, 4
    %v847 = vadd.f32 %v845, %v846
    %v848 = vrot.slane %v847, 2
    %v849 = vadd.f32 %v847, %v848
    %v850 = vrot.slane %v849, 1
    %v851 = vadd.f32 %v849, %v850
    %v852 = vsub.f32 0.0, %v830
    %v853 = vsub.f32 0.0, %v837
    %v854 = vsub.f32 0.0, %v844
    %v855 = vsub.f32 0.0, %v851
    %v856 = vsub.f32 0.0, %v852
    %v857 = vsub.f32 0.0, %v853
    %v858 = vsub.f32 0.0, %v854
    %v859 = vsub.f32 0.0, %v855
    %v860 = vmul.f32 %v856, 1.442695
    %v861 = vpow.pop %v860
    %v862 = vmul.f32 %v857, 1.442695
    %v863 = vpow.pop %v862
    %v864 = vmul.f32 %v858, 1.442695
    %v865 = vpow.pop %v864
    %v866 = vmul.f32 %v859, 1.442695
    %v867 = vpow.pop %v866
    %v868 = vmul.f32 %v760, %v861
    %v869 = vmul.f32 %v761, %v863
    %v870 = vmul.f32 %v762, %v865
    %v871 = vmul.f32 %v763, %v867
    %v872 = vcombine.low %v868, %v870
    %v873 = vcombine.high %v868, %v870
    %v875 = vunpack.c.l.s4 1983009808
    %v876 = vunpack.c.0.s8 %v875
    %v877 = vlaneseq
    %v878 = vshrl.u32 %v877, 7
    %v879 = vsub.s32 %v876, %v878
    %v880 = vrot.slane %v872, %v879
    %v882 = vunpack.c.l.s4 1983009808
    %v883 = vunpack.c.0.s8 %v882
    %v884 = vlaneseq
    %v885 = vshrl.u32 %v884, 7
    %v886 = vsub.s32 %v883, %v885
    %v887 = vrot.slane %v873, %v886
    %v888 = vcombine.low %v869, %v871
    %v889 = vcombine.high %v869, %v871
    %v891 = vunpack.c.l.s4 1983009808
    %v892 = vunpack.c.0.s8 %v891
    %v893 = vlaneseq
    %v894 = vshrl.u32 %v893, 7
    %v895 = vsub.s32 %v892, %v894
    %v896 = vrot.slane %v888, %v895
    %v898 = vunpack.c.l.s4 1983009808
    %v899 = vunpack.c.0.s8 %v898
    %v900 = vlaneseq
    %v901 = vshrl.u32 %v900, 7
    %v902 = vsub.s32 %v899, %v901
    %v903 = vrot.slane %v889, %v902
    %v904 = vcombine.low %v880, %v896
    %v905 = vcombine.high %v880, %v896
    %v907 = vunpack.c.l.s4 1934713408
    %v908 = vunpack.c.0.s8 %v907
    %v909 = vlaneseq
    %v910 = vshrl.u32 %v909, 7
    %v911 = vsub.s32 %v908, %v910
    %v912 = vrot.slane %v904, %v911
    %v914 = vunpack.c.l.s4 1934713408
    %v915 = vunpack.c.0.s8 %v914
    %v916 = vlaneseq
    %v917 = vshrl.u32 %v916, 7
    %v918 = vsub.s32 %v915, %v917
    %v919 = vrot.slane %v905, %v918
    %v920 = vcombine.low %v887, %v903
    %v921 = vcombine.high %v887, %v903
    %v923 = vunpack.c.l.s4 1934713408
    %v924 = vunpack.c.0.s8 %v923
    %v925 = vlaneseq
    %v926 = vshrl.u32 %v925, 7
    %v927 = vsub.s32 %v924, %v926
    %v928 = vrot.slane %v920, %v927
    %v930 = vunpack.c.l.s4 1934713408
    %v931 = vunpack.c.0.s8 %v930
    %v932 = vlaneseq
    %v933 = vshrl.u32 %v932, 7
    %v934 = vsub.s32 %v931, %v933
    %v935 = vrot.slane %v921, %v934
    %v936 = vcombine.high %v912, 0.0
    %v937 = vcombine.high %v919, 0.0
    %v938 = vcombine.high %v928, 0.0
    %v939 = vcombine.high %v935, 0.0
    %941 = vrot.lane.b32.xlu0 %v936, 16
    %v942 = vpop.permute.xlu0 %941
    %945 = vrot.lane.b32.xlu0 %v919, 32
    %v946 = vpop.permute.xlu0 %945
    %949 = vrot.lane.b32.xlu0 %v937, 48
    %v950 = vpop.permute.xlu0 %949
    %953 = vrot.lane.b32.xlu0 %v928, 64
    %v954 = vpop.permute.xlu0 %953
    %957 = vrot.lane.b32.xlu0 %v938, 80
    %v958 = vpop.permute.xlu0 %957
    %961 = vrot.lane.b32.xlu0 %v935, 96
    %v962 = vpop.permute.xlu0 %961
    %965 = vrot.lane.b32.xlu0 %v939, 112
    %v966 = vpop.permute.xlu0 %965
    %v968 = vsel %vm200, %v912, %v942
    %v969 = vsel %vm109, %v968, %v946
    %vm970 = vcmask 392192
    %v971 = vsel %vm970, %v969, %v950
    %vm972 = vcmask 523264
    %v973 = vsel %vm972, %v971, %v954
    %vm974 = vcmask 654336
    %v975 = vsel %vm974, %v973, %v958
    %vm976 = vcmask 785408
    %v977 = vsel %vm976, %v975, %v962
    %vm978 = vcmask 916480
    %v979 = vsel %vm978, %v977, %v966
    %980 = vxpose.xlu0.b32.start [1/16] %v979, 128
    %981 = vxpose.xlu0.b32.cont [2/16] 0.0, 128
    %982 = vxpose.xlu0.b32.cont [3/16] 0.0, 128
    %983 = vxpose.xlu0.b32.cont [4/16] 0.0, 128
    %984 = vxpose.xlu0.b32.cont [5/16] 0.0, 128
    %985 = vxpose.xlu0.b32.cont [6/16] 0.0, 128
    %986 = vxpose.xlu0.b32.cont [7/16] 0.0, 128
    %987 = vxpose.xlu0.b32.cont [8/16] 0.0, 128
    %988 = vxpose.xlu0.b32.cont [9/16] 0.0, 128
    %989 = vxpose.xlu0.b32.cont [10/16] 0.0, 128
    %990 = vxpose.xlu0.b32.cont [11/16] 0.0, 128
    %991 = vxpose.xlu0.b32.cont [12/16] 0.0, 128
    %992 = vxpose.xlu0.b32.cont [13/16] 0.0, 128
    %993 = vxpose.xlu0.b32.cont [14/16] 0.0, 128
    %994 = vxpose.xlu0.b32.cont [15/16] 0.0, 128
    %995 = vxpose.xlu0.b32.end [16/16] 0.0, 128
    %v996 = vpop.trf.xlu0
    %v997 = vpop.trf.xlu0
    %v998 = vpop.trf.xlu0
    %v999 = vpop.trf.xlu0
    %v1000 = vpop.trf.xlu0
    %v1001 = vpop.trf.xlu0
    %v1002 = vpop.trf.xlu0
    %v1003 = vpop.trf.xlu0
    %v1004 = vpop.trf.xlu0
    %v1005 = vpop.trf.xlu0
    %v1006 = vpop.trf.xlu0
    %v1007 = vpop.trf.xlu0
    %v1008 = vpop.trf.xlu0
    %v1009 = vpop.trf.xlu0
    %v1010 = vpop.trf.xlu0
    %v1011 = vpop.trf.xlu0
    %v1012 = vld [vmem:[%s7] sm:$0xf]
    %vm1013 = vcmask 31744
    %v1015 = vsel %vm1013, %v996, 0
    %v1018 = vsel %vm1013, %v997, 0
    %v1021 = vsel %vm1013, %v998, 0
    %v1024 = vsel %vm1013, %v999, 0
    %v1027 = vsel %vm1013, %v1000, 0
    %v1030 = vsel %vm1013, %v1001, 0
    %v1033 = vsel %vm1013, %v1002, 0
    %v1036 = vsel %vm1013, %v1003, 0
    %v1039 = vsel %vm1013, %v1004, 0
    %v1042 = vsel %vm1013, %v1005, 0
    %v1045 = vsel %vm1013, %v1006, 0
    %v1048 = vsel %vm1013, %v1007, 0
    %v1051 = vsel %vm1013, %v1008, 0
    %v1054 = vsel %vm1013, %v1009, 0
    %v1057 = vsel %vm1013, %v1010, 0
    %v1060 = vsel %vm1013, %v1011, 0
    %vm1062 = vcmask 1043456
    %v1064 = vsel %vm1062, %v1012, 0
    %1066 = vmatprep.subr.mxu0 0.0
    %1067 = vmatpush1.msra.mxu0 %v1064
    %1068 = vmatprep.subr.mxu0 0.0
    %1069 = vmatpush1.msra.mxu0 0.0
    %1070 = vmatprep.subr.mxu0 0.0
    %1071 = vmatpush1.msra.mxu0 0.0
    %1072 = vmatprep.subr.mxu0 0.0
    %1073 = vmatpush1.msra.mxu0 0.0
    %1074 = vmatprep.subr.mxu0 0.0
    %1075 = vmatpush1.msra.mxu0 0.0
    %1076 = vmatprep.subr.mxu0 0.0
    %1077 = vmatpush1.msra.mxu0 0.0
    %1078 = vmatprep.subr.mxu0 0.0
    %1079 = vmatpush1.msra.mxu0 0.0
    %1080 = vmatprep.subr.mxu0 0.0
    %1081 = vmatpush1.msra.mxu0 0.0
    %1082 = vmatprep.subr.mxu0 0.0
    %1083 = vmatpush1.msra.mxu0 0.0
    %1084 = vmatprep.subr.mxu0 0.0
    %1085 = vmatpush1.msra.mxu0 0.0
    %1086 = vmatprep.subr.mxu0 0.0
    %1087 = vmatpush1.msra.mxu0 0.0
    %1088 = vmatprep.subr.mxu0 0.0
    %1089 = vmatpush1.msra.mxu0 0.0
    %1090 = vmatprep.subr.mxu0 0.0
    %1091 = vmatpush1.msra.mxu0 0.0
    %1092 = vmatprep.subr.mxu0 0.0
    %1093 = vmatpush1.msra.mxu0 0.0
    %1094 = vmatprep.subr.mxu0 0.0
    %1095 = vmatpush1.msra.mxu0 0.0
    %1096 = vmatprep.subr.mxu0 0.0
    %1097 = vmatpush1.msra.mxu0 0.0
    %1098 = vmatprep.subr.mxu0 0.0
    %1099 = vmatpush1.msra.mxu0 0.0
    %1100 = vmatprep.subr.mxu0 0.0
    %1101 = vmatpush1.msra.mxu0 0.0
    %1102 = vmatprep.subr.mxu0 0.0
    %1103 = vmatpush1.msra.mxu0 0.0
    %1104 = vmatprep.subr.mxu0 0.0
    %1105 = vmatpush1.msra.mxu0 0.0
    %1106 = vmatprep.subr.mxu0 0.0
    %1107 = vmatpush1.msra.mxu0 0.0
    %1108 = vmatprep.subr.mxu0 0.0
    %1109 = vmatpush1.msra.mxu0 0.0
    %1110 = vmatprep.subr.mxu0 0.0
    %1111 = vmatpush1.msra.mxu0 0.0
    %1112 = vmatprep.subr.mxu0 0.0
    %1113 = vmatpush1.msra.mxu0 0.0
    %1114 = vmatprep.subr.mxu0 0.0
    %1115 = vmatpush1.msra.mxu0 0.0
    %1116 = vmatprep.subr.mxu0 0.0
    %1117 = vmatpush1.msra.mxu0 0.0
    %1118 = vmatprep.subr.mxu0 0.0
    %1119 = vmatpush1.msra.mxu0 0.0
    %1120 = vmatprep.subr.mxu0 0.0
    %1121 = vmatpush1.msra.mxu0 0.0
    %1122 = vmatprep.subr.mxu0 0.0
    %1123 = vmatpush1.msra.mxu0 0.0
    %1124 = vmatprep.subr.mxu0 0.0
    %1125 = vmatpush1.msra.mxu0 0.0
    %1126 = vmatprep.subr.mxu0 0.0
    %1127 = vmatpush1.msra.mxu0 0.0
    %1128 = vmatprep.subr.mxu0 0.0
    %1129 = vmatpush1.msra.mxu0 0.0
    %1130 = vmatprep.mubr.f32.mxu0 0.0
    %1131 = vmatmul.mubr.f32.gmra.mrb[0].mxu0 %v1015
    %v1132 = vpop.f32.mrb[0].mxu0
    %v1133 = vadd.f32 0.0, %v1132
    %v1134 = vpop.f32.mrb[0].mxu0
    %1135 = vmatprep.mubr.f32.mxu0 0.0
    %1136 = vmatmul.mubr.f32.gmra.mrb[0].mxu0 %v1018
    %v1137 = vpop.f32.mrb[0].mxu0
    %v1138 = vadd.f32 0.0, %v1137
    %v1139 = vpop.f32.mrb[0].mxu0
    %1140 = vmatprep.mubr.f32.mxu0 0.0
    %1141 = vmatmul.mubr.f32.gmra.mrb[0].mxu0 %v1021
    %v1142 = vpop.f32.mrb[0].mxu0
    %v1143 = vadd.f32 0.0, %v1142
    %v1144 = vpop.f32.mrb[0].mxu0
    %1145 = vmatprep.mubr.f32.mxu0 0.0
    %1146 = vmatmul.mubr.f32.gmra.mrb[0].mxu0 %v1024
    %v1147 = vpop.f32.mrb[0].mxu0
    %v1148 = vadd.f32 0.0, %v1147
    %v1149 = vpop.f32.mrb[0].mxu0
    %1150 = vmatprep.mubr.f32.mxu0 0.0
    %1151 = vmatmul.mubr.f32.gmra.mrb[0].mxu0 %v1027
    %v1152 = vpop.f32.mrb[0].mxu0
    %v1153 = vadd.f32 0.0, %v1152
    %v1154 = vpop.f32.mrb[0].mxu0
    %1155 = vmatprep.mubr.f32.mxu0 0.0
    %1156 = vmatmul.mubr.f32.gmra.mrb[0].mxu0 %v1030
    %v1157 = vpop.f32.mrb[0].mxu0
    %v1158 = vadd.f32 0.0, %v1157
    %v1159 = vpop.f32.mrb[0].mxu0
    %1160 = vmatprep.mubr.f32.mxu0 0.0
    %1161 = vmatmul.mubr.f32.gmra.mrb[0].mxu0 %v1033
    %v1162 = vpop.f32.mrb[0].mxu0
    %v1163 = vadd.f32 0.0, %v1162
    %v1164 = vpop.f32.mrb[0].mxu0
    %1165 = vmatprep.mubr.f32.mxu0 0.0
    %1166 = vmatmul.mubr.f32.gmra.mrb[0].mxu0 %v1036
    %v1167 = vpop.f32.mrb[0].mxu0
    %v1168 = vadd.f32 0.0, %v1167
    %v1169 = vpop.f32.mrb[0].mxu0
    %1170 = vmatprep.mubr.f32.mxu0 0.0
    %1171 = vmatmul.mubr.f32.gmra.mrb[0].mxu0 %v1039
    %v1172 = vpop.f32.mrb[0].mxu0
    %v1173 = vadd.f32 0.0, %v1172
    %v1174 = vpop.f32.mrb[0].mxu0
    %1175 = vmatprep.mubr.f32.mxu0 0.0
    %1176 = vmatmul.mubr.f32.gmra.mrb[0].mxu0 %v1042
    %v1177 = vpop.f32.mrb[0].mxu0
    %v1178 = vadd.f32 0.0, %v1177
    %v1179 = vpop.f32.mrb[0].mxu0
    %1180 = vmatprep.mubr.f32.mxu0 0.0
    %1181 = vmatmul.mubr.f32.gmra.mrb[0].mxu0 %v1045
    %v1182 = vpop.f32.mrb[0].mxu0
    %v1183 = vadd.f32 0.0, %v1182
    %v1184 = vpop.f32.mrb[0].mxu0
    %1185 = vmatprep.mubr.f32.mxu0 0.0
    %1186 = vmatmul.mubr.f32.gmra.mrb[0].mxu0 %v1048
    %v1187 = vpop.f32.mrb[0].mxu0
    %v1188 = vadd.f32 0.0, %v1187
    %v1189 = vpop.f32.mrb[0].mxu0
    %1190 = vmatprep.mubr.f32.mxu0 0.0
    %1191 = vmatmul.mubr.f32.gmra.mrb[0].mxu0 %v1051
    %v1192 = vpop.f32.mrb[0].mxu0
    %v1193 = vadd.f32 0.0, %v1192
    %v1194 = vpop.f32.mrb[0].mxu0
    %1195 = vmatprep.mubr.f32.mxu0 0.0
    %1196 = vmatmul.mubr.f32.gmra.mrb[0].mxu0 %v1054
    %v1197 = vpop.f32.mrb[0].mxu0
    %v1198 = vadd.f32 0.0, %v1197
    %v1199 = vpop.f32.mrb[0].mxu0
    %1200 = vmatprep.mubr.f32.mxu0 0.0
    %1201 = vmatmul.mubr.f32.gmra.mrb[0].mxu0 %v1057
    %v1202 = vpop.f32.mrb[0].mxu0
    %v1203 = vadd.f32 0.0, %v1202
    %v1204 = vpop.f32.mrb[0].mxu0
    %1205 = vmatprep.mubr.f32.mxu0 0.0
    %1206 = vmatmul.mubr.f32.gmra.mrb[0].mxu0 %v1060
    %v1207 = vpop.f32.mrb[0].mxu0
    %v1208 = vadd.f32 0.0, %v1207
    %v1209 = vpop.f32.mrb[0].mxu0
    %1210 = vdwg.mxu0
    %v1211 = vmul.f32 %v1133, %v183
    %v1212 = vmul.f32 %v1138, %v188
    %v1213 = vmul.f32 %v1143, %v183
    %v1214 = vmul.f32 %v1148, %v188
    %v1215 = vmul.f32 %v1153, %v183
    %v1216 = vmul.f32 %v1158, %v188
    %v1217 = vmul.f32 %v1163, %v183
    %v1218 = vmul.f32 %v1168, %v188
    %v1219 = vmul.f32 %v1173, %v183
    %v1220 = vmul.f32 %v1178, %v188
    %v1221 = vmul.f32 %v1183, %v183
    %v1222 = vmul.f32 %v1188, %v188
    %v1223 = vmul.f32 %v1193, %v183
    %v1224 = vmul.f32 %v1198, %v188
    %v1225 = vmul.f32 %v1203, %v183
    %v1226 = vmul.f32 %v1208, %v188
    %1227 = vst [vmem:[#allocation11] sm:$0xff] %v1211
    %1228 = vst [vmem:[#allocation11 + $0x8] sm:$0xff] %v1212
    %1229 = vst [vmem:[#allocation11 + $0x10] sm:$0xff] %v1213
    %1230 = vst [vmem:[#allocation11 + $0x18] sm:$0xff] %v1214
    %1231 = vst [vmem:[#allocation11 + $0x20] sm:$0xff] %v1215
    %1232 = vst [vmem:[#allocation11 + $0x28] sm:$0xff] %v1216
    %1233 = vst [vmem:[#allocation11 + $0x30] sm:$0xff] %v1217
    %1234 = vst [vmem:[#allocation11 + $0x38] sm:$0xff] %v1218
    %1235 = vst [vmem:[#allocation11 + $0x40] sm:$0xff] %v1219
    %1236 = vst [vmem:[#allocation11 + $0x48] sm:$0xff] %v1220
    %1237 = vst [vmem:[#allocation11 + $0x50] sm:$0xff] %v1221
    %1238 = vst [vmem:[#allocation11 + $0x58] sm:$0xff] %v1222
    %1239 = vst [vmem:[#allocation11 + $0x60] sm:$0xff] %v1223
    %1240 = vst [vmem:[#allocation11 + $0x68] sm:$0xff] %v1224
    %1241 = vst [vmem:[#allocation11 + $0x70] sm:$0xff] %v1225
    %1242 = vst [vmem:[#allocation11 + $0x78] sm:$0xff] %v1226
    // Predicated region
    $region54: #{track_builder_forward.1} parent=1 // pred_check
      _
    $region55: #{track_builder_forward.1} parent=1 // pred_check_branch
      %1244 = sbr.rel (0) target = $region57
    $region56: #{track_builder_forward.1} parent=1 // pred_region
      %s1246 = ssub.s32 2048, 2048
      %1247 = vsyncadd [#allocation4], %s1246
      %s1248 = sshll.u32 [#allocation11], 4
      %s1249 = int_to_ptr.vmem [resolvable:$true] %s1248
      %1254 = dma.vmem_to_hbm [thread:$0]  %s1249, 2048, %s8, [#allocation4], 128, 128, 8
    $region57: #{track_builder_forward.1} parent=1 // pred_fallthru
      _
    // Predicated region
    $region58: #{track_builder_forward.1} parent=1 // pred_check
      _
    $region59: #{track_builder_forward.1} parent=1 // pred_check_branch
      %1256 = sbr.rel (0) target = $region61
    $region60: #{track_builder_forward.1} parent=1 // pred_region
      _
    $region61: #{track_builder_forward.1} parent=1 // pred_fallthru
      _
    // Predicated region
    $region62: #{track_builder_forward.1} parent=1 // pred_check
      _
    $region63: #{track_builder_forward.1} parent=1 // pred_check_branch
      %1258 = sbr.rel (0) target = $region65
    $region64: #{track_builder_forward.1} parent=1 // pred_region
      %1259 = dma.done [#allocation4], 2048
    $region65: #{track_builder_forward.1} parent=1 // pred_fallthru
      _
    // Predicated region
    $region66: #{track_builder_forward.1} parent=1 // pred_check
      _
    $region67: #{track_builder_forward.1} parent=1 // pred_check_branch
      %1261 = sbr.rel (0) target = $region69
    $region68: #{track_builder_forward.1} parent=1 // pred_region
      _
    $region69: #{track_builder_forward.1} parent=1 // pred_fallthru
      _
    %1262 = vsyncpa [#allocation3], 1
    %1263 = vsyncpa [#allocation6], 1
    %1264 = vsyncpa [#allocation9], 1
    %1265 = vsyncpa [#allocation4], 1

</llo_original>
